<compile_context>
chip_gen: v7x
topology: tpu7x:2x2x1
jax: 0.10.0
libtpu: 0.0.40
codegen_flags: <defaults>
</compile_context>

<pallas_src>
import functools

import jax
import jax.numpy as jnp
from jax.experimental import pallas as pl
from jax.experimental.pallas import tpu as pltpu


def _round_up(n, m):
    return -(-n // m) * m


def _encoder_kernel(x_ref, w1_ref, b1_ref, w2_ref, b2_ref, o_ref, *,
                    kh, kw, w_img):
    """Fused Conv->ReLU->Conv->ReLU in a flat (C, N*H*W) lane layout.

    x_ref : (Cin_p, L)            VMEM  (L = N*H*W, batch folded on lanes)
    w1_ref: (C1_p, KH*KW*Cin_p)   VMEM  (im2col-flattened, tap-major/cin-minor)
    b1_ref: (C1_p, 1)             VMEM
    w2_ref: (C2_p, KH*KW*C1_p)    VMEM
    b2_ref: (C2_p, 1)             VMEM
    o_ref : (C2_p, L)             VMEM  (padded slab, lane-dense store)
    """
    L = x_ref.shape[-1]

    def conv_relu(a, w_ref, b_ref):
        # a: (cin_p, L).  One lane roll per tap; stack taps on sublanes
        # (cin_p is a multiple of 8 -> aligned stacking), then one MXU matmul.
        def shifted(s):
            return a if s == 0 else pltpu.roll(a, shift=(L - s) % L, axis=1)

        taps = [shifted(i * w_img + j) for i in range(kh) for j in range(kw)]
        patches = jnp.concatenate(taps, axis=0)          # (kh*kw*cin_p, L)
        # NOTE: default MXU precision matches the lax.conv reference; pass
        # precision=jax.lax.Precision.HIGHEST here if exact-f32 is required.
        acc = jnp.dot(w_ref[...], patches,
                      preferred_element_type=jnp.float32)
        return jnp.maximum(acc + b_ref[...], 0.0)        # bias bcast + ReLU

    h = conv_relu(x_ref[...], w1_ref, b1_ref)            # (C1_p, L), stays in VMEM
    o_ref[...] = conv_relu(h, w2_ref, b2_ref).astype(o_ref.dtype)


def init_encoder_params(key,
                        num_input_channels=3,
                        num_middle_channels=8,
                        num_latent_channels=8,
                        kernel_size=3):
    """PyTorch-style init; weights stored in PyTorch OIHW layout."""
    k1, k2, k3, k4 = jax.random.split(key, 4)

    def conv_init(kw_, kb_, cin, cout, k):
        bound = 1.0 / (cin * k * k) ** 0.5
        w = jax.random.uniform(kw_, (cout, cin, k, k),
                               minval=-bound, maxval=bound, dtype=jnp.float32)
        b = jax.random.uniform(kb_, (cout,),
                               minval=-bound, maxval=bound, dtype=jnp.float32)
        return w, b

    w1, b1 = conv_init(k1, k2, num_input_channels, num_middle_channels,
                       kernel_size)
    w2, b2 = conv_init(k3, k4, num_middle_channels, num_latent_channels,
                       kernel_size)
    return {"w1": w1, "b1": b1, "w2": w2, "b2": b2}


@functools.partial(jax.jit, static_argnames=("interpret",))
def encoder_forward(params, x_nchw, interpret=False):
    """Matches Encoder.forward: input/output in NCHW."""
    # TODO(synk): stride/padding fixed to the module defaults (1, 0);
    # non-default values would need a different tap-shift / crop scheme.
    N, Cin, H, W = x_nchw.shape
    w1, b1, w2, b2 = params["w1"], params["b1"], params["w2"], params["b2"]
    C1, _, KH, KW = w1.shape
    C2 = w2.shape[0]
    Ho2, Wo2 = H - 2 * (KH - 1), W - 2 * (KW - 1)
    L = N * H * W

    cin_p = _round_up(Cin, 8)
    c1_p = _round_up(C1, 8)
    c2_p = _round_up(C2, 8)

    # Input: NCHW -> (Cin_p, N*H*W) with batch folded on lanes (tiny xforms
    # on a few KiB; keeps every kernel vreg fully lane-occupied).
    x_flat = jnp.transpose(x_nchw, (1, 0, 2, 3)).reshape(Cin, L)
    x_flat = jnp.pad(x_flat, ((0, cin_p - Cin), (0, 0)))

    # Weights: OIHW -> (Cout_p, KH*KW*Cin_p), column order (i, j, cin) to
    # match the tap-major / cin-minor patch stacking in the kernel.
    def flat_w(w, cout_p, cin_pad):
        cout, cin = w.shape[0], w.shape[1]
        wt = jnp.transpose(w, (0, 2, 3, 1))              # (O, KH, KW, I)
        wt = jnp.pad(wt, ((0, cout_p - cout), (0, 0), (0, 0),
                          (0, cin_pad - cin)))
        return wt.reshape(cout_p, KH * KW * cin_pad)

    w1f = flat_w(w1, c1_p, cin_p)
    w2f = flat_w(w2, c2_p, c1_p)
    b1f = jnp.pad(b1, ((0, c1_p - C1),)).reshape(c1_p, 1)
    b2f = jnp.pad(b2, ((0, c2_p - C2),)).reshape(c2_p, 1)

    kernel = functools.partial(_encoder_kernel, kh=KH, kw=KW, w_img=W)
    vmem_spec = pl.BlockSpec(memory_space=pltpu.MemorySpace.VMEM)

    out_flat = pl.pallas_call(
        kernel,
        out_shape=jax.ShapeDtypeStruct((c2_p, L), x_nchw.dtype),
        in_specs=[vmem_spec] * 5,
        out_specs=vmem_spec,
        interpret=interpret,
    )(x_flat, w1f, b1f, w2f, b2f)

    # Crop padded channels / garbage border and restore NCHW (tiny XLA ops).
    out = out_flat[:C2].reshape(C2, N, H, W)
    return jnp.transpose(out, (1, 0, 2, 3))[:, :, :Ho2, :Wo2]


def _reference_forward(params, x_nchw):
    """Pure-JAX reference (lax.conv) for a correctness sanity check."""
    def conv(x, w, b):
        y = jax.lax.conv_general_dilated(
            x, w, window_strides=(1, 1), padding="VALID",
            dimension_numbers=("NCHW", "OIHW", "NCHW"))
        return jnp.maximum(y + b[None, :, None, None], 0.0)
    return conv(conv(x_nchw, params["w1"], params["b1"]),
                params["w2"], params["b2"])


if __name__ == "__main__":
    key = jax.random.PRNGKey(0)
    kp, kx = jax.random.split(key)

    params = init_encoder_params(kp)
    x = jax.random.normal(kx, (2, 3, 16, 16), dtype=jnp.float32)  # NCHW

    out = jax.block_until_ready(encoder_forward(params, x))

    ref = _reference_forward(params, x)
    assert out.shape == (2, 8, 12, 12), out.shape
    assert jnp.allclose(out, ref, atol=2e-4, rtol=2e-4)

    print("KERNEL_OK")
</pallas_src>

<mosaic_0001>
module attributes {stable_mosaic.version = 11 : i64} {
  func.func @_encoder_kernel(%arg0: memref<8x512xf32, #tpu.memory_space<vmem>>, %arg1: memref<8x72xf32, #tpu.memory_space<vmem>>, %arg2: memref<8x1xf32, #tpu.memory_space<vmem>>, %arg3: memref<8x72xf32, #tpu.memory_space<vmem>>, %arg4: memref<8x1xf32, #tpu.memory_space<vmem>>, %arg5: memref<8x512xf32, #tpu.memory_space<vmem>>) attributes {dimension_semantics = [], scalar_prefetch = 0 : i64, scratch_operands = 0 : i64, tpu.core_type = #tpu.core_type<tc>} {
    %c0 = arith.constant 0 : index
    %c0_0 = arith.constant 0 : index
    %0 = vector.load %arg0[%c0, %c0_0] : memref<8x512xf32, #tpu.memory_space<vmem>>, vector<8x512xf32>
    %c511_i32 = arith.constant 511 : i32
    %1 = tpu.dynamic_rotate %0 by %c511_i32 dim 1 : vector<8x512xf32>, i32 -> vector<8x512xf32>
    %c510_i32 = arith.constant 510 : i32
    %2 = tpu.dynamic_rotate %0 by %c510_i32 dim 1 : vector<8x512xf32>, i32 -> vector<8x512xf32>
    %c496_i32 = arith.constant 496 : i32
    %3 = tpu.dynamic_rotate %0 by %c496_i32 dim 1 : vector<8x512xf32>, i32 -> vector<8x512xf32>
    %c495_i32 = arith.constant 495 : i32
    %4 = tpu.dynamic_rotate %0 by %c495_i32 dim 1 : vector<8x512xf32>, i32 -> vector<8x512xf32>
    %c494_i32 = arith.constant 494 : i32
    %5 = tpu.dynamic_rotate %0 by %c494_i32 dim 1 : vector<8x512xf32>, i32 -> vector<8x512xf32>
    %c480_i32 = arith.constant 480 : i32
    %6 = tpu.dynamic_rotate %0 by %c480_i32 dim 1 : vector<8x512xf32>, i32 -> vector<8x512xf32>
    %c479_i32 = arith.constant 479 : i32
    %7 = tpu.dynamic_rotate %0 by %c479_i32 dim 1 : vector<8x512xf32>, i32 -> vector<8x512xf32>
    %c478_i32 = arith.constant 478 : i32
    %8 = tpu.dynamic_rotate %0 by %c478_i32 dim 1 : vector<8x512xf32>, i32 -> vector<8x512xf32>
    %9 = tpu.concatenate %0, %1, %2, %3, %4, %5, %6, %7, %8 in 0 : vector<8x512xf32>, vector<8x512xf32>, vector<8x512xf32>, vector<8x512xf32>, vector<8x512xf32>, vector<8x512xf32>, vector<8x512xf32>, vector<8x512xf32>, vector<8x512xf32> -> vector<72x512xf32>
    %c0_1 = arith.constant 0 : index
    %c0_2 = arith.constant 0 : index
    %10 = vector.load %arg1[%c0_1, %c0_2] : memref<8x72xf32, #tpu.memory_space<vmem>>, vector<8x72xf32>
    %cst = arith.constant dense<0.000000e+00> : vector<8x512xf32>
    %11 = tpu.matmul %10, %9, %cst {dimension_numbers = #tpu.dot_dimension_numbers<[1], [0], [0], [1], [0, 0, 1, 1], [], []>} : vector<8x72xf32>, vector<72x512xf32>, vector<8x512xf32> -> vector<8x512xf32>
    %c0_3 = arith.constant 0 : index
    %c0_4 = arith.constant 0 : index
    %12 = vector.load %arg2[%c0_3, %c0_4] : memref<8x1xf32, #tpu.memory_space<vmem>>, vector<8x1xf32>
    %13 = vector.broadcast %12 : vector<8x1xf32> to vector<8x512xf32>
    %14 = arith.addf %11, %13 : vector<8x512xf32>
    %cst_5 = arith.constant 0.000000e+00 : f32
    %15 = vector.broadcast %cst_5 : f32 to vector<8x512xf32>
    %16 = arith.maximumf %14, %15 : vector<8x512xf32>
    %c511_i32_6 = arith.constant 511 : i32
    %17 = tpu.dynamic_rotate %16 by %c511_i32_6 dim 1 : vector<8x512xf32>, i32 -> vector<8x512xf32>
    %c510_i32_7 = arith.constant 510 : i32
    %18 = tpu.dynamic_rotate %16 by %c510_i32_7 dim 1 : vector<8x512xf32>, i32 -> vector<8x512xf32>
    %c496_i32_8 = arith.constant 496 : i32
    %19 = tpu.dynamic_rotate %16 by %c496_i32_8 dim 1 : vector<8x512xf32>, i32 -> vector<8x512xf32>
    %c495_i32_9 = arith.constant 495 : i32
    %20 = tpu.dynamic_rotate %16 by %c495_i32_9 dim 1 : vector<8x512xf32>, i32 -> vector<8x512xf32>
    %c494_i32_10 = arith.constant 494 : i32
    %21 = tpu.dynamic_rotate %16 by %c494_i32_10 dim 1 : vector<8x512xf32>, i32 -> vector<8x512xf32>
    %c480_i32_11 = arith.constant 480 : i32
    %22 = tpu.dynamic_rotate %16 by %c480_i32_11 dim 1 : vector<8x512xf32>, i32 -> vector<8x512xf32>
    %c479_i32_12 = arith.constant 479 : i32
    %23 = tpu.dynamic_rotate %16 by %c479_i32_12 dim 1 : vector<8x512xf32>, i32 -> vector<8x512xf32>
    %c478_i32_13 = arith.constant 478 : i32
    %24 = tpu.dynamic_rotate %16 by %c478_i32_13 dim 1 : vector<8x512xf32>, i32 -> vector<8x512xf32>
    %25 = tpu.concatenate %16, %17, %18, %19, %20, %21, %22, %23, %24 in 0 : vector<8x512xf32>, vector<8x512xf32>, vector<8x512xf32>, vector<8x512xf32>, vector<8x512xf32>, vector<8x512xf32>, vector<8x512xf32>, vector<8x512xf32>, vector<8x512xf32> -> vector<72x512xf32>
    %c0_14 = arith.constant 0 : index
    %c0_15 = arith.constant 0 : index
    %26 = vector.load %arg3[%c0_14, %c0_15] : memref<8x72xf32, #tpu.memory_space<vmem>>, vector<8x72xf32>
    %cst_16 = arith.constant dense<0.000000e+00> : vector<8x512xf32>
    %27 = tpu.matmul %26, %25, %cst_16 {dimension_numbers = #tpu.dot_dimension_numbers<[1], [0], [0], [1], [0, 0, 1, 1], [], []>} : vector<8x72xf32>, vector<72x512xf32>, vector<8x512xf32> -> vector<8x512xf32>
    %c0_17 = arith.constant 0 : index
    %c0_18 = arith.constant 0 : index
    %28 = vector.load %arg4[%c0_17, %c0_18] : memref<8x1xf32, #tpu.memory_space<vmem>>, vector<8x1xf32>
    %29 = vector.broadcast %28 : vector<8x1xf32> to vector<8x512xf32>
    %30 = arith.addf %27, %29 : vector<8x512xf32>
    %cst_19 = arith.constant 0.000000e+00 : f32
    %31 = vector.broadcast %cst_19 : f32 to vector<8x512xf32>
    %32 = arith.maximumf %30, %31 : vector<8x512xf32>
    %c0_20 = arith.constant 0 : index
    %c0_21 = arith.constant 0 : index
    %33 = vector.load %arg5[%c0_20, %c0_21] : memref<8x512xf32, #tpu.memory_space<vmem>>, vector<8x512xf32>
    tpu.vector_store %arg5[%c0_20, %c0_21], %32 {strides = array<i32>} : memref<8x512xf32, #tpu.memory_space<vmem>>, vector<8x512xf32>,
    return
  }
}

</mosaic_0001>

<llo_original>
// kernel: encoder_forward.1
$region0: #{encoder_forward.1}
  #allocation0 [shape = 'u32[]', space=smem, size = 0x4, offset = 0x4, fixed_abs, tag = 'smem constant byte address 0x4 - core index']
  #allocation1 [shape = 'u32[144,128]{1,0:T(1,128)}', space=vmem, size = 0x12000, scoped, tag = 'internal scratch']
  %s0 = inlined_call_operand.vmem [shape: f32[8,512], index: 0, kind: input, shape index: {}]
  %s1 = inlined_call_operand.vmem [shape: f32[8,72], index: 1, kind: input, shape index: {}]
  %s2 = inlined_call_operand.vmem [shape: f32[8,1], index: 2, kind: input, shape index: {}]
  %s3 = inlined_call_operand.vmem [shape: f32[8,72], index: 3, kind: input, shape index: {}]
  %s4 = inlined_call_operand.vmem [shape: f32[8,1], index: 4, kind: input, shape index: {}]
  %s5 = inlined_call_operand.vmem [shape: f32[8,512], index: 5, kind: output, shape index: {}]
  %s6 = sld [smem:[#allocation0]]
  $region30: #{encoder_forward.1} parent=0
    _
  %s8 = ssub.s32 1, %s6
  %s9 = scalar_select 0, %s8, %s6
  // Predicated region
  $region2: #{encoder_forward.1} parent=0 // pred_check
    _
  $region3: #{encoder_forward.1} parent=0 // pred_check_branch
    %11 = sbr.rel (0) target = $region5
  $region4: #{encoder_forward.1} parent=0 // pred_region
    _
  $region5: #{encoder_forward.1} parent=0 // pred_fallthru
    _
  // Predicated region
  $region6: #{encoder_forward.1} parent=0 // pred_check
    _
  $region7: #{encoder_forward.1} parent=0 // pred_check_branch
    %13 = sbr.rel (0) target = $region9
  $region8: #{encoder_forward.1} parent=0 // pred_region
    _
  $region9: #{encoder_forward.1} parent=0 // pred_fallthru
    _
  // Predicated region
  $region10: #{encoder_forward.1} parent=0 // pred_check
    _
  $region11: #{encoder_forward.1} parent=0 // pred_check_branch
    %15 = sbr.rel (0) target = $region13
  $region12: #{encoder_forward.1} parent=0 // pred_region
    _
  $region13: #{encoder_forward.1} parent=0 // pred_fallthru
    _
  // Predicated region
  $region14: #{encoder_forward.1} parent=0 // pred_check
    _
  $region15: #{encoder_forward.1} parent=0 // pred_check_branch
    %17 = sbr.rel (0) target = $region17
  $region16: #{encoder_forward.1} parent=0 // pred_region
    _
  $region17: #{encoder_forward.1} parent=0 // pred_fallthru
    _
  // Predicated region
  $region18: #{encoder_forward.1} parent=0 // pred_check
    _
  $region19: #{encoder_forward.1} parent=0 // pred_check_branch
    %19 = sbr.rel (0) target = $region21
  $region20: #{encoder_forward.1} parent=0 // pred_region
    _
  $region21: #{encoder_forward.1} parent=0 // pred_fallthru
    _
  %v20 = vld [vmem:[%s0] sm:$0xff]
  %v21 = vld [vmem:[%s0 + $0x8] sm:$0xff]
  %v22 = vld [vmem:[%s0 + $0x10] sm:$0xff]
  %v23 = vld [vmem:[%s0 + $0x18] sm:$0xff]
  %24 = vrot.lane.b32.xlu0 %v20, 127
  %v25 = vpop.permute.xlu0 %24
  %26 = vrot.lane.b32.xlu0 %v21, 127
  %v27 = vpop.permute.xlu0 %26
  %28 = vrot.lane.b32.xlu0 %v22, 127
  %v29 = vpop.permute.xlu0 %28
  %30 = vrot.lane.b32.xlu0 %v23, 127
  %v31 = vpop.permute.xlu0 %30
  %v32 = vlaneseq
  %v33 = vand.u32 %v32, 127
  %vm34 = vcmp.lt.s32.totalorder %v33, 127
  %v35 = vsel %vm34, %v29, %v31
  %v36 = vsel %vm34, %v27, %v29
  %v37 = vsel %vm34, %v25, %v27
  %v38 = vsel %vm34, %v31, %v25
  %39 = vrot.lane.b32.xlu0 %v20, 126
  %v40 = vpop.permute.xlu0 %39
  %41 = vrot.lane.b32.xlu0 %v21, 126
  %v42 = vpop.permute.xlu0 %41
  %43 = vrot.lane.b32.xlu0 %v22, 126
  %v44 = vpop.permute.xlu0 %43
  %45 = vrot.lane.b32.xlu0 %v23, 126
  %v46 = vpop.permute.xlu0 %45
  %vm47 = vcmp.lt.s32.totalorder %v33, 126
  %v48 = vsel %vm47, %v44, %v46
  %v49 = vsel %vm47, %v42, %v44
  %v50 = vsel %vm47, %v40, %v42
  %v51 = vsel %vm47, %v46, %v40
  %52 = vrot.lane.b32.xlu0 %v20, 112
  %v53 = vpop.permute.xlu0 %52
  %54 = vrot.lane.b32.xlu0 %v21, 112
  %v55 = vpop.permute.xlu0 %54
  %56 = vrot.lane.b32.xlu0 %v22, 112
  %v57 = vpop.permute.xlu0 %56
  %58 = vrot.lane.b32.xlu0 %v23, 112
  %v59 = vpop.permute.xlu0 %58
  %vm60 = vcmp.lt.s32.totalorder %v33, 112
  %v61 = vsel %vm60, %v57, %v59
  %v62 = vsel %vm60, %v55, %v57
  %v63 = vsel %vm60, %v53, %v55
  %v64 = vsel %vm60, %v59, %v53
  %65 = vrot.lane.b32.xlu0 %v20, 111
  %v66 = vpop.permute.xlu0 %65
  %67 = vrot.lane.b32.xlu0 %v21, 111
  %v68 = vpop.permute.xlu0 %67
  %69 = vrot.lane.b32.xlu0 %v22, 111
  %v70 = vpop.permute.xlu0 %69
  %71 = vrot.lane.b32.xlu0 %v23, 111
  %v72 = vpop.permute.xlu0 %71
  %vm73 = vcmp.lt.s32.totalorder %v33, 111
  %v74 = vsel %vm73, %v70, %v72
  %v75 = vsel %vm73, %v68, %v70
  %v76 = vsel %vm73, %v66, %v68
  %v77 = vsel %vm73, %v72, %v66
  %78 = vrot.lane.b32.xlu0 %v20, 110
  %v79 = vpop.permute.xlu0 %78
  %80 = vrot.lane.b32.xlu0 %v21, 110
  %v81 = vpop.permute.xlu0 %80
  %82 = vrot.lane.b32.xlu0 %v22, 110
  %v83 = vpop.permute.xlu0 %82
  %84 = vrot.lane.b32.xlu0 %v23, 110
  %v85 = vpop.permute.xlu0 %84
  %vm86 = vcmp.lt.s32.totalorder %v33, 110
  %v87 = vsel %vm86, %v83, %v85
  %v88 = vsel %vm86, %v81, %v83
  %v89 = vsel %vm86, %v79, %v81
  %v90 = vsel %vm86, %v85, %v79
  %91 = vrot.lane.b32.xlu0 %v20, 96
  %v92 = vpop.permute.xlu0 %91
  %93 = vrot.lane.b32.xlu0 %v21, 96
  %v94 = vpop.permute.xlu0 %93
  %95 = vrot.lane.b32.xlu0 %v22, 96
  %v96 = vpop.permute.xlu0 %95
  %97 = vrot.lane.b32.xlu0 %v23, 96
  %v98 = vpop.permute.xlu0 %97
  %vm99 = vcmp.lt.s32.totalorder %v33, 96
  %v100 = vsel %vm99, %v96, %v98
  %v101 = vsel %vm99, %v94, %v96
  %v102 = vsel %vm99, %v92, %v94
  %v103 = vsel %vm99, %v98, %v92
  %104 = vrot.lane.b32.xlu0 %v20, 95
  %v105 = vpop.permute.xlu0 %104
  %106 = vrot.lane.b32.xlu0 %v21, 95
  %v107 = vpop.permute.xlu0 %106
  %108 = vrot.lane.b32.xlu0 %v22, 95
  %v109 = vpop.permute.xlu0 %108
  %110 = vrot.lane.b32.xlu0 %v23, 95
  %v111 = vpop.permute.xlu0 %110
  %vm112 = vcmp.lt.s32.totalorder %v33, 95
  %v113 = vsel %vm112, %v109, %v111
  %v114 = vsel %vm112, %v107, %v109
  %v115 = vsel %vm112, %v105, %v107
  %v116 = vsel %vm112, %v111, %v105
  %117 = vrot.lane.b32.xlu0 %v20, 94
  %v118 = vpop.permute.xlu0 %117
  %119 = vrot.lane.b32.xlu0 %v21, 94
  %v120 = vpop.permute.xlu0 %119
  %121 = vrot.lane.b32.xlu0 %v22, 94
  %v122 = vpop.permute.xlu0 %121
  %123 = vrot.lane.b32.xlu0 %v23, 94
  %v124 = vpop.permute.xlu0 %123
  %vm125 = vcmp.lt.s32.totalorder %v33, 94
  %v126 = vsel %vm125, %v122, %v124
  %v127 = vsel %vm125, %v120, %v122
  %v128 = vsel %vm125, %v118, %v120
  %v129 = vsel %vm125, %v124, %v118
  %v130 = vld [vmem:[%s1] sm:$0xff]
  %v131 = vld [vmem:[%s2] sm:$0xff]
  %133 = vset.pattern.permute.xlu0 0
  %134 = vperm.xlu0 %133, %v131
  %v135 = vpop.permute.xlu0 %134
  %vm137 = vcmask 588800
  %v139 = vsel %vm137, %v130, 0
  %141 = vmatprep.subr.mxu0 %v21
  %142 = vmatpush1.msra.mxu0 %v20
  %143 = vmatprep.subr.mxu0 %v36
  %144 = vmatpush1.msra.mxu0 %v37
  %145 = vmatprep.subr.mxu0 %v49
  %146 = vmatpush1.msra.mxu0 %v50
  %147 = vmatprep.subr.mxu0 %v62
  %148 = vmatpush1.msra.mxu0 %v63
  %149 = vmatprep.subr.mxu0 %v75
  %150 = vmatpush1.msra.mxu0 %v76
  %151 = vmatprep.subr.mxu0 %v88
  %152 = vmatpush1.msra.mxu0 %v89
  %153 = vmatprep.subr.mxu0 %v101
  %154 = vmatpush1.msra.mxu0 %v102
  %155 = vmatprep.subr.mxu0 %v114
  %156 = vmatpush1.msra.mxu0 %v115
  %157 = vmatprep.subr.mxu0 %v127
  %158 = vmatpush1.msra.mxu0 %v128
  %159 = vmatprep.subr.mxu0 0.0
  %160 = vmatpush1.msra.mxu0 0.0
  %161 = vmatprep.subr.mxu0 0.0
  %162 = vmatpush1.msra.mxu0 0.0
  %163 = vmatprep.subr.mxu0 0.0
  %164 = vmatpush1.msra.mxu0 0.0
  %165 = vmatprep.subr.mxu0 0.0
  %166 = vmatpush1.msra.mxu0 0.0
  %167 = vmatprep.subr.mxu0 0.0
  %168 = vmatpush1.msra.mxu0 0.0
  %169 = vmatprep.subr.mxu0 0.0
  %170 = vmatpush1.msra.mxu0 0.0
  %171 = vmatprep.subr.mxu0 0.0
  %172 = vmatpush1.msra.mxu0 0.0
  %173 = vmatprep.subr.mxu0 0.0
  %174 = vmatpush1.msra.mxu0 0.0
  %175 = vmatprep.subr.mxu0 0.0
  %176 = vmatpush1.msra.mxu0 0.0
  %177 = vmatprep.subr.mxu0 0.0
  %178 = vmatpush1.msra.mxu0 0.0
  %179 = vmatprep.subr.mxu0 0.0
  %180 = vmatpush1.msra.mxu0 0.0
  %181 = vmatprep.subr.mxu0 0.0
  %182 = vmatpush1.msra.mxu0 0.0
  %183 = vmatprep.subr.mxu0 0.0
  %184 = vmatpush1.msra.mxu0 0.0
  %185 = vmatprep.subr.mxu0 0.0
  %186 = vmatpush1.msra.mxu0 0.0
  %187 = vmatprep.subr.mxu0 0.0
  %188 = vmatpush1.msra.mxu0 0.0
  %189 = vmatprep.subr.mxu0 0.0
  %190 = vmatpush1.msra.mxu0 0.0
  %191 = vmatprep.subr.mxu0 0.0
  %192 = vmatpush1.msra.mxu0 0.0
  %193 = vmatprep.subr.mxu0 0.0
  %194 = vmatpush1.msra.mxu0 0.0
  %195 = vmatprep.subr.mxu0 0.0
  %196 = vmatpush1.msra.mxu0 0.0
  %197 = vmatprep.subr.mxu0 0.0
  %198 = vmatpush1.msra.mxu0 0.0
  %199 = vmatprep.subr.mxu0 0.0
  %200 = vmatpush1.msra.mxu0 0.0
  %201 = vmatprep.subr.mxu0 0.0
  %202 = vmatpush1.msra.mxu0 0.0
  %203 = vmatprep.subr.mxu0 0.0
  %204 = vmatpush1.msra.mxu0 0.0
  %205 = vmatprep.mubr.f32.mxu0 0.0
  %206 = vmatmul.mubr.f32.gmra.mrb[0].mxu0 %v139
  %v207 = vpop.f32.mrb[0].mxu0
  %v208 = vadd.f32 %v135, %v207
  %v209 = vpop.f32.mrb[0].mxu0
  %v210 = vadd.f32 %v135, %v209
  %211 = vdwg.mxu0
  %212 = vmatprep.subr.mxu0 %v23
  %213 = vmatpush1.msra.mxu0 %v22
  %214 = vmatprep.subr.mxu0 %v38
  %215 = vmatpush1.msra.mxu0 %v35
  %216 = vmatprep.subr.mxu0 %v51
  %217 = vmatpush1.msra.mxu0 %v48
  %218 = vmatprep.subr.mxu0 %v64
  %219 = vmatpush1.msra.mxu0 %v61
  %220 = vmatprep.subr.mxu0 %v77
  %221 = vmatpush1.msra.mxu0 %v74
  %222 = vmatprep.subr.mxu0 %v90
  %223 = vmatpush1.msra.mxu0 %v87
  %224 = vmatprep.subr.mxu0 %v103
  %225 = vmatpush1.msra.mxu0 %v100
  %226 = vmatprep.subr.mxu0 %v116
  %227 = vmatpush1.msra.mxu0 %v113
  %228 = vmatprep.subr.mxu0 %v129
  %229 = vmatpush1.msra.mxu0 %v126
  %230 = vmatprep.subr.mxu0 0.0
  %231 = vmatpush1.msra.mxu0 0.0
  %232 = vmatprep.subr.mxu0 0.0
  %233 = vmatpush1.msra.mxu0 0.0
  %234 = vmatprep.subr.mxu0 0.0
  %235 = vmatpush1.msra.mxu0 0.0
  %236 = vmatprep.subr.mxu0 0.0
  %237 = vmatpush1.msra.mxu0 0.0
  %238 = vmatprep.subr.mxu0 0.0
  %239 = vmatpush1.msra.mxu0 0.0
  %240 = vmatprep.subr.mxu0 0.0
  %241 = vmatpush1.msra.mxu0 0.0
  %242 = vmatprep.subr.mxu0 0.0
  %243 = vmatpush1.msra.mxu0 0.0
  %244 = vmatprep.subr.mxu0 0.0
  %245 = vmatpush1.msra.mxu0 0.0
  %246 = vmatprep.subr.mxu0 0.0
  %247 = vmatpush1.msra.mxu0 0.0
  %248 = vmatprep.subr.mxu0 0.0
  %249 = vmatpush1.msra.mxu0 0.0
  %250 = vmatprep.subr.mxu0 0.0
  %251 = vmatpush1.msra.mxu0 0.0
  %252 = vmatprep.subr.mxu0 0.0
  %253 = vmatpush1.msra.mxu0 0.0
  %254 = vmatprep.subr.mxu0 0.0
  %255 = vmatpush1.msra.mxu0 0.0
  %256 = vmatprep.subr.mxu0 0.0
  %257 = vmatpush1.msra.mxu0 0.0
  %258 = vmatprep.subr.mxu0 0.0
  %259 = vmatpush1.msra.mxu0 0.0
  %260 = vmatprep.subr.mxu0 0.0
  %261 = vmatpush1.msra.mxu0 0.0
  %262 = vmatprep.subr.mxu0 0.0
  %263 = vmatpush1.msra.mxu0 0.0
  %264 = vmatprep.subr.mxu0 0.0
  %265 = vmatpush1.msra.mxu0 0.0
  %266 = vmatprep.subr.mxu0 0.0
  %267 = vmatpush1.msra.mxu0 0.0
  %268 = vmatprep.subr.mxu0 0.0
  %269 = vmatpush1.msra.mxu0 0.0
  %270 = vmatprep.subr.mxu0 0.0
  %271 = vmatpush1.msra.mxu0 0.0
  %272 = vmatprep.subr.mxu0 0.0
  %273 = vmatpush1.msra.mxu0 0.0
  %274 = vmatprep.subr.mxu0 0.0
  %275 = vmatpush1.msra.mxu0 0.0
  %276 = vmatprep.mubr.f32.mxu0 0.0
  %277 = vmatmul.mubr.f32.gmra.mrb[0].mxu0 %v139
  %v278 = vpop.f32.mrb[0].mxu0
  %v279 = vadd.f32 %v135, %v278
  %v280 = vpop.f32.mrb[0].mxu0
  %v281 = vadd.f32 %v135, %v280
  %282 = vdwg.mxu0
  %v283 = vmax.f32 %v208, 0.0
  %v284 = vmax.f32 %v210, 0.0
  %v285 = vmax.f32 %v279, 0.0
  %v286 = vmax.f32 %v281, 0.0
  %287 = vrot.lane.b32.xlu0 %v283, 127
  %v288 = vpop.permute.xlu0 %287
  %289 = vrot.lane.b32.xlu0 %v284, 127
  %v290 = vpop.permute.xlu0 %289
  %291 = vrot.lane.b32.xlu0 %v285, 127
  %v292 = vpop.permute.xlu0 %291
  %293 = vrot.lane.b32.xlu0 %v286, 127
  %v294 = vpop.permute.xlu0 %293
  %v295 = vsel %vm34, %v292, %v294
  %v296 = vsel %vm34, %v290, %v292
  %v297 = vsel %vm34, %v288, %v290
  %v298 = vsel %vm34, %v294, %v288
  %299 = vrot.lane.b32.xlu0 %v283, 126
  %v300 = vpop.permute.xlu0 %299
  %301 = vrot.lane.b32.xlu0 %v284, 126
  %v302 = vpop.permute.xlu0 %301
  %303 = vrot.lane.b32.xlu0 %v285, 126
  %v304 = vpop.permute.xlu0 %303
  %305 = vrot.lane.b32.xlu0 %v286, 126
  %v306 = vpop.permute.xlu0 %305
  %v307 = vsel %vm47, %v304, %v306
  %v308 = vsel %vm47, %v302, %v304
  %v309 = vsel %vm47, %v300, %v302
  %v310 = vsel %vm47, %v306, %v300
  %311 = vrot.lane.b32.xlu0 %v283, 112
  %v312 = vpop.permute.xlu0 %311
  %313 = vrot.lane.b32.xlu0 %v284, 112
  %v314 = vpop.permute.xlu0 %313
  %315 = vrot.lane.b32.xlu0 %v285, 112
  %v316 = vpop.permute.xlu0 %315
  %317 = vrot.lane.b32.xlu0 %v286, 112
  %v318 = vpop.permute.xlu0 %317
  %v319 = vsel %vm60, %v316, %v318
  %v320 = vsel %vm60, %v314, %v316
  %v321 = vsel %vm60, %v312, %v314
  %v322 = vsel %vm60, %v318, %v312
  %323 = vrot.lane.b32.xlu0 %v283, 111
  %v324 = vpop.permute.xlu0 %323
  %325 = vrot.lane.b32.xlu0 %v284, 111
  %v326 = vpop.permute.xlu0 %325
  %327 = vrot.lane.b32.xlu0 %v285, 111
  %v328 = vpop.permute.xlu0 %327
  %329 = vrot.lane.b32.xlu0 %v286, 111
  %v330 = vpop.permute.xlu0 %329
  %v331 = vsel %vm73, %v328, %v330
  %v332 = vsel %vm73, %v326, %v328
  %v333 = vsel %vm73, %v324, %v326
  %v334 = vsel %vm73, %v330, %v324
  %335 = vrot.lane.b32.xlu0 %v283, 110
  %v336 = vpop.permute.xlu0 %335
  %337 = vrot.lane.b32.xlu0 %v284, 110
  %v338 = vpop.permute.xlu0 %337
  %339 = vrot.lane.b32.xlu0 %v285, 110
  %v340 = vpop.permute.xlu0 %339
  %341 = vrot.lane.b32.xlu0 %v286, 110
  %v342 = vpop.permute.xlu0 %341
  %v343 = vsel %vm86, %v340, %v342
  %v344 = vsel %vm86, %v338, %v340
  %v345 = vsel %vm86, %v336, %v338
  %v346 = vsel %vm86, %v342, %v336
  %347 = vrot.lane.b32.xlu0 %v283, 96
  %v348 = vpop.permute.xlu0 %347
  %349 = vrot.lane.b32.xlu0 %v284, 96
  %v350 = vpop.permute.xlu0 %349
  %351 = vrot.lane.b32.xlu0 %v285, 96
  %v352 = vpop.permute.xlu0 %351
  %353 = vrot.lane.b32.xlu0 %v286, 96
  %v354 = vpop.permute.xlu0 %353
  %v355 = vsel %vm99, %v352, %v354
  %v356 = vsel %vm99, %v350, %v352
  %v357 = vsel %vm99, %v348, %v350
  %v358 = vsel %vm99, %v354, %v348
  %359 = vrot.lane.b32.xlu0 %v283, 95
  %v360 = vpop.permute.xlu0 %359
  %361 = vrot.lane.b32.xlu0 %v284, 95
  %v362 = vpop.permute.xlu0 %361
  %363 = vrot.lane.b32.xlu0 %v285, 95
  %v364 = vpop.permute.xlu0 %363
  %365 = vrot.lane.b32.xlu0 %v286, 95
  %v366 = vpop.permute.xlu0 %365
  %v367 = vsel %vm112, %v364, %v366
  %v368 = vsel %vm112, %v362, %v364
  %v369 = vsel %vm112, %v360, %v362
  %v370 = vsel %vm112, %v366, %v360
  %371 = vrot.lane.b32.xlu0 %v283, 94
  %v372 = vpop.permute.xlu0 %371
  %373 = vrot.lane.b32.xlu0 %v284, 94
  %v374 = vpop.permute.xlu0 %373
  %375 = vrot.lane.b32.xlu0 %v285, 94
  %v376 = vpop.permute.xlu0 %375
  %377 = vrot.lane.b32.xlu0 %v286, 94
  %v378 = vpop.permute.xlu0 %377
  %v379 = vsel %vm125, %v376, %v378
  %v380 = vsel %vm125, %v374, %v376
  %v381 = vsel %vm125, %v372, %v374
  %v382 = vsel %vm125, %v378, %v372
  %v383 = vld [vmem:[%s3] sm:$0xff]
  %v384 = vld [vmem:[%s4] sm:$0xff]
  %386 = vset.pattern.permute.xlu0 0
  %387 = vperm.xlu0 %386, %v384
  %v388 = vpop.permute.xlu0 %387
  %v391 = vsel %vm137, %v383, 0
  %393 = vmatprep.subr.mxu0 %v284
  %394 = vmatpush1.msra.mxu0 %v283
  %395 = vmatprep.subr.mxu0 %v296
  %396 = vmatpush1.msra.mxu0 %v297
  %397 = vmatprep.subr.mxu0 %v308
  %398 = vmatpush1.msra.mxu0 %v309
  %399 = vmatprep.subr.mxu0 %v320
  %400 = vmatpush1.msra.mxu0 %v321
  %401 = vmatprep.subr.mxu0 %v332
  %402 = vmatpush1.msra.mxu0 %v333
  %403 = vmatprep.subr.mxu0 %v344
  %404 = vmatpush1.msra.mxu0 %v345
  %405 = vmatprep.subr.mxu0 %v356
  %406 = vmatpush1.msra.mxu0 %v357
  %407 = vmatprep.subr.mxu0 %v368
  %408 = vmatpush1.msra.mxu0 %v369
  %409 = vmatprep.subr.mxu0 %v380
  %410 = vmatpush1.msra.mxu0 %v381
  %411 = vmatprep.subr.mxu0 0.0
  %412 = vmatpush1.msra.mxu0 0.0
  %413 = vmatprep.subr.mxu0 0.0
  %414 = vmatpush1.msra.mxu0 0.0
  %415 = vmatprep.subr.mxu0 0.0
  %416 = vmatpush1.msra.mxu0 0.0
  %417 = vmatprep.subr.mxu0 0.0
  %418 = vmatpush1.msra.mxu0 0.0
  %419 = vmatprep.subr.mxu0 0.0
  %420 = vmatpush1.msra.mxu0 0.0
  %421 = vmatprep.subr.mxu0 0.0
  %422 = vmatpush1.msra.mxu0 0.0
  %423 = vmatprep.subr.mxu0 0.0
  %424 = vmatpush1.msra.mxu0 0.0
  %425 = vmatprep.subr.mxu0 0.0
  %426 = vmatpush1.msra.mxu0 0.0
  %427 = vmatprep.subr.mxu0 0.0
  %428 = vmatpush1.msra.mxu0 0.0
  %429 = vmatprep.subr.mxu0 0.0
  %430 = vmatpush1.msra.mxu0 0.0
  %431 = vmatprep.subr.mxu0 0.0
  %432 = vmatpush1.msra.mxu0 0.0
  %433 = vmatprep.subr.mxu0 0.0
  %434 = vmatpush1.msra.mxu0 0.0
  %435 = vmatprep.subr.mxu0 0.0
  %436 = vmatpush1.msra.mxu0 0.0
  %437 = vmatprep.subr.mxu0 0.0
  %438 = vmatpush1.msra.mxu0 0.0
  %439 = vmatprep.subr.mxu0 0.0
  %440 = vmatpush1.msra.mxu0 0.0
  %441 = vmatprep.subr.mxu0 0.0
  %442 = vmatpush1.msra.mxu0 0.0
  %443 = vmatprep.subr.mxu0 0.0
  %444 = vmatpush1.msra.mxu0 0.0
  %445 = vmatprep.subr.mxu0 0.0
  %446 = vmatpush1.msra.mxu0 0.0
  %447 = vmatprep.subr.mxu0 0.0
  %448 = vmatpush1.msra.mxu0 0.0
  %449 = vmatprep.subr.mxu0 0.0
  %450 = vmatpush1.msra.mxu0 0.0
  %451 = vmatprep.subr.mxu0 0.0
  %452 = vmatpush1.msra.mxu0 0.0
  %453 = vmatprep.subr.mxu0 0.0
  %454 = vmatpush1.msra.mxu0 0.0
  %455 = vmatprep.subr.mxu0 0.0
  %456 = vmatpush1.msra.mxu0 0.0
  %457 = vmatprep.mubr.f32.mxu0 0.0
  %458 = vmatmul.mubr.f32.gmra.mrb[0].mxu0 %v391
  %v459 = vpop.f32.mrb[0].mxu0
  %v460 = vadd.f32 %v388, %v459
  %v461 = vpop.f32.mrb[0].mxu0
  %v462 = vadd.f32 %v388, %v461
  %463 = vdwg.mxu0
  %464 = vmatprep.subr.mxu0 %v286
  %465 = vmatpush1.msra.mxu0 %v285
  %466 = vmatprep.subr.mxu0 %v298
  %467 = vmatpush1.msra.mxu0 %v295
  %468 = vmatprep.subr.mxu0 %v310
  %469 = vmatpush1.msra.mxu0 %v307
  %470 = vmatprep.subr.mxu0 %v322
  %471 = vmatpush1.msra.mxu0 %v319
  %472 = vmatprep.subr.mxu0 %v334
  %473 = vmatpush1.msra.mxu0 %v331
  %474 = vmatprep.subr.mxu0 %v346
  %475 = vmatpush1.msra.mxu0 %v343
  %476 = vmatprep.subr.mxu0 %v358
  %477 = vmatpush1.msra.mxu0 %v355
  %478 = vmatprep.subr.mxu0 %v370
  %479 = vmatpush1.msra.mxu0 %v367
  %480 = vmatprep.subr.mxu0 %v382
  %481 = vmatpush1.msra.mxu0 %v379
  %482 = vmatprep.subr.mxu0 0.0
  %483 = vmatpush1.msra.mxu0 0.0
  %484 = vmatprep.subr.mxu0 0.0
  %485 = vmatpush1.msra.mxu0 0.0
  %486 = vmatprep.subr.mxu0 0.0
  %487 = vmatpush1.msra.mxu0 0.0
  %488 = vmatprep.subr.mxu0 0.0
  %489 = vmatpush1.msra.mxu0 0.0
  %490 = vmatprep.subr.mxu0 0.0
  %491 = vmatpush1.msra.mxu0 0.0
  %492 = vmatprep.subr.mxu0 0.0
  %493 = vmatpush1.msra.mxu0 0.0
  %494 = vmatprep.subr.mxu0 0.0
  %495 = vmatpush1.msra.mxu0 0.0
  %496 = vmatprep.subr.mxu0 0.0
  %497 = vmatpush1.msra.mxu0 0.0
  %498 = vmatprep.subr.mxu0 0.0
  %499 = vmatpush1.msra.mxu0 0.0
  %500 = vmatprep.subr.mxu0 0.0
  %501 = vmatpush1.msra.mxu0 0.0
  %502 = vmatprep.subr.mxu0 0.0
  %503 = vmatpush1.msra.mxu0 0.0
  %504 = vmatprep.subr.mxu0 0.0
  %505 = vmatpush1.msra.mxu0 0.0
  %506 = vmatprep.subr.mxu0 0.0
  %507 = vmatpush1.msra.mxu0 0.0
  %508 = vmatprep.subr.mxu0 0.0
  %509 = vmatpush1.msra.mxu0 0.0
  %510 = vmatprep.subr.mxu0 0.0
  %511 = vmatpush1.msra.mxu0 0.0
  %512 = vmatprep.subr.mxu0 0.0
  %513 = vmatpush1.msra.mxu0 0.0
  %514 = vmatprep.subr.mxu0 0.0
  %515 = vmatpush1.msra.mxu0 0.0
  %516 = vmatprep.subr.mxu0 0.0
  %517 = vmatpush1.msra.mxu0 0.0
  %518 = vmatprep.subr.mxu0 0.0
  %519 = vmatpush1.msra.mxu0 0.0
  %520 = vmatprep.subr.mxu0 0.0
  %521 = vmatpush1.msra.mxu0 0.0
  %522 = vmatprep.subr.mxu0 0.0
  %523 = vmatpush1.msra.mxu0 0.0
  %524 = vmatprep.subr.mxu0 0.0
  %525 = vmatpush1.msra.mxu0 0.0
  %526 = vmatprep.subr.mxu0 0.0
  %527 = vmatpush1.msra.mxu0 0.0
  %528 = vmatprep.mubr.f32.mxu0 0.0
  %529 = vmatmul.mubr.f32.gmra.mrb[0].mxu0 %v391
  %v530 = vpop.f32.mrb[0].mxu0
  %v531 = vadd.f32 %v388, %v530
  %v532 = vpop.f32.mrb[0].mxu0
  %v533 = vadd.f32 %v388, %v532
  %534 = vdwg.mxu0
  %v535 = vmax.f32 %v460, 0.0
  %v536 = vmax.f32 %v462, 0.0
  %v537 = vmax.f32 %v531, 0.0
  %v538 = vmax.f32 %v533, 0.0
  %539 = vst [vmem:[%s5] sm:$0xff] %v535
  %540 = vst [vmem:[%s5 + $0x8] sm:$0xff] %v536
  %541 = vst [vmem:[%s5 + $0x10] sm:$0xff] %v537
  %542 = vst [vmem:[%s5 + $0x18] sm:$0xff] %v538
  // Predicated region
  $region22: #{encoder_forward.1} parent=0 // pred_check
    _
  $region23: #{encoder_forward.1} parent=0 // pred_check_branch
    %544 = sbr.rel (0) target = $region25
  $region24: #{encoder_forward.1} parent=0 // pred_region
    _
  $region25: #{encoder_forward.1} parent=0 // pred_fallthru
    _
  // Predicated region
  $region26: #{encoder_forward.1} parent=0 // pred_check
    _
  $region27: #{encoder_forward.1} parent=0 // pred_check_branch
    %546 = sbr.rel (0) target = $region29
  $region28: #{encoder_forward.1} parent=0 // pred_region
    _
  $region29: #{encoder_forward.1} parent=0 // pred_fallthru
    _

</llo_original>
